<compile_context>
chip_gen: v5e
topology: v5e:2x2
jax: 0.10.0
libtpu: 0.0.40
codegen_flags: <defaults>
</compile_context>

<pallas_src>
import jax
import jax.numpy as jnp
from jax.experimental import pallas as pl
from jax.experimental.pallas import tpu as pltpu


def _round_up(x: int, m: int) -> int:
    return ((x + m - 1) // m) * m


def _make_rbf_kernel(low, gap, coef, n_centers, out_dtype, exp_dtype, transposed):
    def rbf_kernel(dist_ref, out_ref):
        if transposed:
            # dist_ref: (1, tile) lane-dense; out_ref: (n_centers, tile)
            d = dist_ref[...]                                                # (1, tile)
            k = jax.lax.broadcasted_iota(jnp.int32, (n_centers, 1), 0)
            c = low + gap * k.astype(jnp.float32)                            # (n_centers, 1)
        else:
            # dist_ref: (tile, 1); out_ref: (tile, n_centers)
            d = dist_ref[...]                                                # (tile, 1)
            k = jax.lax.broadcasted_iota(jnp.int32, (1, n_centers), 1)
            c = low + gap * k.astype(jnp.float32)                            # (1, n_centers)
        diff = d - c
        arg = coef * (diff * diff)                                           # f32
        if exp_dtype is not None:
            # Opt-in: bf16 exp roughly doubles EUP throughput on v6e/v7x.
            out_ref[...] = jnp.exp(arg.astype(exp_dtype)).astype(out_dtype)
        else:
            out_ref[...] = jnp.exp(arg).astype(out_dtype)

    return rbf_kernel


def rbf_layer(dist, low=0.0, high=30.0, n_centers=150, *,
              tile_e=4096, out_dtype=jnp.float32, exp_dtype=None,
              transposed=False, out_buffer_count=2):
    """RBF embedding of edge distances.

    transposed=False (default): returns (E, n_centers), exact PyTorch layout.
    transposed=True  (fast path): returns (n_centers, E) with fully lane-dense
        exp/stores — use when the consumer can accept the transposed layout.
    """
    E = int(dist.shape[0])
    out_dtype = jnp.dtype(out_dtype)
    itemsize = out_dtype.itemsize
    packing = max(1, 4 // itemsize)          # rows packed per 32-bit sublane group

    # Module parameters (deterministic, from __init__).
    gap = (high - low) / (n_centers - 1)     # == centers[1] - centers[0]
    coef = -1.0 / gap

    if E == 0:
        shape = (n_centers, 0) if transposed else (0, n_centers)
        return jnp.zeros(shape, out_dtype)

    # ---------------- tile selection --------------------------------------
    if transposed:
        granule = 128                        # E on lanes
    else:
        granule = 8 * packing                # E on sublanes; honor dtype packing

    def _buffer_bytes(t):                    # double-buffered pipeline footprint
        if transposed:
            in_b = 8 * t * 4                                           # (1,t) pads to 8 sublanes
            out_b = _round_up(n_centers, 8 * packing) * t * itemsize   # 150 -> 152/160
        else:
            in_b = t * 128 * 4                                         # (t,1) lane-pads to 128
            out_b = t * _round_up(n_centers, 128) * itemsize           # 150 -> 256 lanes
        return 2 * (in_b + out_b)

    tile = max(granule, min(int(tile_e), _round_up(E, granule)))
    tile = _round_up(tile, granule)
    # Keep >= 2 grid steps when E allows so "parallel" can use both v7x TCs.
    if E > granule and pl.cdiv(E, tile) == 1:
        tile = _round_up(-(-E // 2), granule)
    # Cap by a VMEM budget that fits v5e/v6e/v7x.
    VMEM_BUDGET = 24 << 20
    while tile > granule and _buffer_bytes(tile) > VMEM_BUDGET:
        tile = _round_up(tile // 2, granule)

    n_steps = pl.cdiv(E, tile)
    E_pad = n_steps * tile

    dist_f32 = dist.astype(jnp.float32).reshape(-1)
    if E_pad != E:
        dist_f32 = jnp.pad(dist_f32, (0, E_pad - E))

    kernel = _make_rbf_kernel(float(low), float(gap), float(coef),
                              int(n_centers), out_dtype, exp_dtype, transposed)

    out_spec_kwargs = {}
    if out_buffer_count != 2:
        out_spec_kwargs["pipeline_mode"] = pl.Buffered(int(out_buffer_count))

    if transposed:
        dist_in = dist_f32.reshape(1, E_pad)
        in_spec = pl.BlockSpec((1, tile), lambda i: (0, i))
        out_spec = pl.BlockSpec((n_centers, tile), lambda i: (0, i), **out_spec_kwargs)
        out_shape = jax.ShapeDtypeStruct((n_centers, E_pad), out_dtype)
    else:
        dist_in = dist_f32.reshape(E_pad, 1)
        in_spec = pl.BlockSpec((tile, 1), lambda i: (i, 0))
        out_spec = pl.BlockSpec((tile, n_centers), lambda i: (i, 0), **out_spec_kwargs)
        out_shape = jax.ShapeDtypeStruct((E_pad, n_centers), out_dtype)

    cost = pl.CostEstimate(
        flops=3 * E_pad * n_centers,
        transcendentals=E_pad * n_centers,
        bytes_accessed=4 * E_pad + E_pad * n_centers * itemsize,
    )
    vmem_limit = int(min(32 << 20, max(16 << 20, _buffer_bytes(tile) + (2 << 20))))

    out = pl.pallas_call(
        kernel,
        out_shape=out_shape,
        grid_spec=pltpu.PrefetchScalarGridSpec(
            num_scalar_prefetch=0,
            grid=(n_steps,),
            in_specs=[in_spec],
            out_specs=out_spec,
        ),
        compiler_params=pltpu.CompilerParams(
            dimension_semantics=("parallel",),   # shards steps across v7x's 2 TCs
            vmem_limit_bytes=vmem_limit,
        ),
        cost_estimate=cost,
    )(dist_in)

    if E_pad != E:
        out = out[:, :E] if transposed else out[:E]
    return out


# TODO(synk): the DGL graph plumbing (g.apply_edges / g.edata) has no Pallas
# equivalent; only the dis2rbf math (the actual forward compute) is implemented.

if __name__ == "__main__":
    key = jax.random.PRNGKey(0)
    E = 200            # number of graph edges (deliberately not a tile multiple)
    low, high, n_centers = 0.0, 30.0, 150

    dist = jax.random.uniform(key, (E,), dtype=jnp.float32, minval=low, maxval=high)

    # Pure-JAX reference (same math as the PyTorch module).
    gap = (high - low) / (n_centers - 1)
    centers = jnp.linspace(low, high, n_centers, dtype=jnp.float32)
    ref = jnp.exp((-1.0 / gap) * (dist.reshape(-1, 1) - centers.reshape(1, -1)) ** 2)

    # 1) Default layout: exact PyTorch forward semantics, (E, n_centers) f32.
    rbf = rbf_layer(dist, low=low, high=high, n_centers=n_centers)
    jax.block_until_ready(rbf)
    assert rbf.shape == (E, n_centers)
    assert jnp.allclose(rbf, ref, atol=1e-5, rtol=1e-5)

    # 2) Lane-dense transposed fast path: (n_centers, E), same math.
    rbf_t = rbf_layer(dist, low=low, high=high, n_centers=n_centers, transposed=True)
    jax.block_until_ready(rbf_t)
    assert rbf_t.shape == (n_centers, E)
    assert jnp.allclose(rbf_t, ref.T, atol=1e-5, rtol=1e-5)

    # 3) Opt-in bf16 output (halves HBM writes); looser tolerance by design.
    rbf_bf16 = rbf_layer(dist, low=low, high=high, n_centers=n_centers,
                         transposed=True, out_dtype=jnp.bfloat16)
    jax.block_until_ready(rbf_bf16)
    assert jnp.allclose(rbf_bf16.astype(jnp.float32), ref.T, atol=2e-2, rtol=2e-2)

    print("KERNEL_OK")
</pallas_src>

<mosaic_0001>
module attributes {stable_mosaic.version = 11 : i64} {
  func.func @rbf_kernel(%arg0: i32, %arg1: memref<104x1xf32, #tpu.memory_space<vmem>>, %arg2: memref<104x150xf32, #tpu.memory_space<vmem>>) attributes {dimension_semantics = [#tpu.dimension_semantics<parallel>], iteration_bounds = array<i64: 2>, scalar_prefetch = 0 : i64, scratch_operands = 0 : i64, tpu.core_type = #tpu.core_type<tc>, window_params = [{transform_indices = @transform_0, window_bounds = array<i64: 104, 1>}, {transform_indices = @transform_1, window_bounds = array<i64: 104, 150>}]} {
    %c0 = arith.constant 0 : index
    %c0_0 = arith.constant 0 : index
    %0 = vector.load %arg1[%c0, %c0_0] : memref<104x1xf32, #tpu.memory_space<vmem>>, vector<104x1xf32>
    %1 = tpu.iota {dimensions = array<i32: 1>} : vector<1x150xi32>
    %2 = arith.sitofp %1 : vector<1x150xi32> to vector<1x150xf32>
    %cst = arith.constant 0.201342285 : f32
    %3 = vector.broadcast %cst : f32 to vector<1x150xf32>
    %4 = arith.mulf %3, %2 : vector<1x150xf32>
    %cst_1 = arith.constant 0.000000e+00 : f32
    %5 = vector.broadcast %cst_1 : f32 to vector<1x150xf32>
    %6 = arith.addf %5, %4 : vector<1x150xf32>
    %7 = vector.broadcast %0 : vector<104x1xf32> to vector<104x150xf32>
    %8 = vector.broadcast %6 : vector<1x150xf32> to vector<104x150xf32>
    %9 = arith.subf %7, %8 : vector<104x150xf32>
    %10 = arith.mulf %9, %9 : vector<104x150xf32>
    %cst_2 = arith.constant -4.9666667 : f32
    %11 = vector.broadcast %cst_2 : f32 to vector<104x150xf32>
    %12 = arith.mulf %11, %10 : vector<104x150xf32>
    %13 = math.exp %12 : vector<104x150xf32>
    %c0_3 = arith.constant 0 : index
    %c0_4 = arith.constant 0 : index
    %14 = vector.load %arg2[%c0_3, %c0_4] : memref<104x150xf32, #tpu.memory_space<vmem>>, vector<104x150xf32>
    tpu.vector_store %arg2[%c0_3, %c0_4], %13 {strides = array<i32>} : memref<104x150xf32, #tpu.memory_space<vmem>>, vector<104x150xf32>,
    return
  }
  func.func @transform_0(%arg0: i32) -> (i32, i32) {
    %c0_i32 = arith.constant 0 : i32
    %c0_i32_0 = arith.constant 0 : i32
    return %arg0, %c0_i32 : i32, i32
  }
  func.func @transform_1(%arg0: i32) -> (i32, i32) {
    %c0_i32 = arith.constant 0 : i32
    %c0_i32_0 = arith.constant 0 : i32
    return %arg0, %c0_i32 : i32, i32
  }
}

</mosaic_0001>

<llo_original>
// kernel: tpu_custom_call.1
$region0: #{tpu_custom_call.1}
  #allocation0 [shape = 'u32[]', space=smem, size = 0x4, offset = 0x4, fixed_abs, tag = 'smem constant byte address 0x4 - core index']
  #allocation1 [shape = 'u32[72,128]{1,0:T(1,128)}', space=vmem, size = 0x9000, scoped, tag = 'internal scratch']
  %s0 = inlined_call_operand.vmem [shape: f32[208,1], index: 0, kind: input, shape index: {}]
  %s1 = inlined_call_operand.vmem [shape: f32[208,150], index: 1, kind: output, shape index: {}]
  %s2 = sld [smem:[#allocation0]]
  $region37: #{tpu_custom_call.1} parent=0
    _
  %s4 = ssub.s32 1, %s2
  %s5 = scalar_select 0, %s4, %s2
  loop: start=0, step=1, limit=4
  $region2: #{tpu_custom_call.1} parent=0 // loop_pre_header
    _
  $region3: #{tpu_custom_call.1} parent=0 // loop_header
    %s7 = sphi 0, %s11
    %p8 = scmp.ge.s32.totalorder %s7, 4
    %s17 = sphi 0, %s19
    %s20 = sphi 0, %s17
    %s21 = sphi 0, %s20
    %s37 = sphi 0, %s21
    %s43 = sphi 0, %s45
    %s46 = sphi 0, %s43
    %s47 = sphi 0, %s46
    %s63 = sphi 0, %s47
  $region4: #{tpu_custom_call.1} parent=0 // loop_header_branch
    %10 = sbr.rel (%p8) target = $region8
  $region5: #{tpu_custom_call.1} parent=0 // loop_body
    %s12 = ssub.s32 %s7, 1
    %s13 = ssub.s32 %s7, 2
    %s14 = sadd.s32 %s7, 1
    %s15 = ssub.s32 %s7, %s14
    %p16 = scmp.eq.s32.totalorder %s15, 0
    %s18 = sadd.s32 %s17, 1
    %s19 = scalar_select %p16, %s17, %s18
    %p22 = pneg %p16
    %p23 = scmp.eq.s32.totalorder %s7, 1
    %p24 = por %p22, %p23
    %p25 = scmp.ne.s32.totalorder %s17, %s20
    %p26 = scmp.eq.s32.totalorder %s7, 0
    %p27 = por %p25, %p26
    %p28 = scmp.ne.s32.totalorder %s17, %s20
    %p29 = scmp.eq.s32.totalorder %s12, 1
    %p30 = por %p28, %p29
    %p31 = scmp.ne.s32.totalorder %s20, %s21
    %p32 = scmp.eq.s32.totalorder %s12, 0
    %p33 = por %p31, %p32
    %p34 = scmp.ne.s32.totalorder %s20, %s21
    %p35 = scmp.eq.s32.totalorder %s13, 1
    %p36 = por %p34, %p35
    %p38 = scmp.ne.s32.totalorder %s21, %s37
    %p39 = scmp.eq.s32.totalorder %s13, 0
    %p40 = por %p38, %p39
    %s41 = ssub.s32 %s7, %s14
    %p42 = scmp.eq.s32.totalorder %s41, 0
    %s44 = sadd.s32 %s43, 1
    %s45 = scalar_select %p42, %s43, %s44
    %p48 = pneg %p42
    %p49 = scmp.eq.s32.totalorder %s7, 1
    %p50 = por %p48, %p49
    %p51 = scmp.ne.s32.totalorder %s43, %s46
    %p52 = scmp.eq.s32.totalorder %s7, 0
    %p53 = por %p51, %p52
    %p54 = scmp.ne.s32.totalorder %s43, %s46
    %p55 = scmp.eq.s32.totalorder %s12, 1
    %p56 = por %p54, %p55
    %p57 = scmp.ne.s32.totalorder %s46, %s47
    %p58 = scmp.eq.s32.totalorder %s12, 0
    %p59 = por %p57, %p58
    %p60 = scmp.ne.s32.totalorder %s46, %s47
    %p61 = scmp.eq.s32.totalorder %s13, 1
    %p62 = por %p60, %p61
    %p64 = scmp.ne.s32.totalorder %s47, %s63
    %p65 = scmp.eq.s32.totalorder %s13, 0
    %p66 = por %p64, %p65
    %p67 = scmp.le.s32.totalorder 1, %s7
    %p68 = scmp.lt.s32.totalorder %s7, 3
    %p69 = pnand %p67, %p68
    %p70 = pneg %p69
    // Predicated region
    $region9: #{tpu_custom_call.1} parent=5 // pred_check
      _
    $region10: #{tpu_custom_call.1} parent=5 // pred_check_branch
      %72 = sbr.rel (%p69) target = $region12
    $region11: #{tpu_custom_call.1} parent=5 // pred_region
      %s73 = ssub.s32 %s7, 1
    $region12: #{tpu_custom_call.1} parent=5 // pred_fallthru
      _
    %p74 = scmp.lt.s32.totalorder %s7, 2
    // Predicated region
    $region13: #{tpu_custom_call.1} parent=5 // pred_check
      %p75 = pneg %p74
    $region14: #{tpu_custom_call.1} parent=5 // pred_check_branch
      %77 = sbr.rel (%p75) target = $region16
    $region15: #{tpu_custom_call.1} parent=5 // pred_region
      // Predicated region
      $region17: #{tpu_custom_call.1} parent=15 // pred_check
        %p78 = pneg %p27
      $region18: #{tpu_custom_call.1} parent=15 // pred_check_branch
        %80 = sbr.rel (%p78) target = $region20
      $region19: #{tpu_custom_call.1} parent=15 // pred_region
        %s81 = smul.u32 13, %s7
        %p82 = scmp.lt.s32.totalorder %s81, 25
        %s83 = scalar_select %p82, %s81, 25
        %s84 = smul.addr %s83, 8
        %s85 = scalar_lea.vmem %s0, %s84
        %s86 = smul.u32 13, %s7
      $region20: #{tpu_custom_call.1} parent=15 // pred_fallthru
        _
    $region16: #{tpu_custom_call.1} parent=5 // pred_fallthru
      _
    %p87 = scmp.le.s32.totalorder 1, %s7
    %p88 = scmp.lt.s32.totalorder %s7, 3
    %p89 = pnand %p87, %p88
    %p90 = pneg %p89
    // Predicated region
    $region21: #{tpu_custom_call.1} parent=5 // pred_check
      _
    $region22: #{tpu_custom_call.1} parent=5 // pred_check_branch
      %92 = sbr.rel (%p89) target = $region24
    $region23: #{tpu_custom_call.1} parent=5 // pred_region
      %s93 = ssub.s32 %s7, 1
      %s94 = smul.u32 13, %s12
      %p95 = scmp.lt.s32.totalorder %s94, 25
      %s96 = scalar_select %p95, %s94, 25
      %s97 = smul.addr %s96, 8
      %s98 = scalar_lea.vmem %s0, %s97
      %p99 = pneg %p33
      %p100 = pneg %p30
      %p101 = pneg %p59
      %p102 = pneg %p56
      %s103 = smul.u32 13, %s12
      %p104 = scmp.lt.s32.totalorder %s103, 25
      %s105 = scalar_select %p104, %s103, 25
      %s106 = smul.addr %s105, 2
      %s107 = smul.addr %s106, 8
      %s108 = scalar_lea.vmem %s1, %s107
      %s109 = smul.u32 13, %s12
      %p110 = scmp.lt.s32.totalorder %s109, 25
      %s111 = scalar_select %p110, %s109, 25
      %s112 = smul.addr %s111, 8
      %s113 = scalar_lea.vmem %s0, %s112
      %s114 = smul.u32 13, %s12
      %s115 = smul.u32 13, %s12
      %p116 = scmp.lt.s32.totalorder %s115, 25
      %s117 = scalar_select %p116, %s115, 25
      %s118 = smul.addr %s117, 2
      %s119 = smul.addr %s118, 8
      %s120 = scalar_lea.vmem %s1, %s119
      %s121 = smul.u32 13, %s12
      %v122 = vld [vmem:[%s113] sm:$0xff]
      %v123 = vld [vmem:[%s113 + $0x8] sm:$0xff]
      %v124 = vld [vmem:[%s113 + $0x10] sm:$0xff]
      %v125 = vld [vmem:[%s113 + $0x18] sm:$0xff]
      %v126 = vld [vmem:[%s113 + $0x20] sm:$0xff]
      %v127 = vld [vmem:[%s113 + $0x28] sm:$0xff]
      %v128 = vld [vmem:[%s113 + $0x30] sm:$0xff]
      %v129 = vld [vmem:[%s113 + $0x38] sm:$0xff]
      %v130 = vld [vmem:[%s113 + $0x40] sm:$0xff]
      %v131 = vld [vmem:[%s113 + $0x48] sm:$0xff]
      %v132 = vld [vmem:[%s113 + $0x50] sm:$0xff]
      %v133 = vld [vmem:[%s113 + $0x58] sm:$0xff]
      %v134 = vld [vmem:[%s113 + $0x60] sm:$0xff]
      %v135 = vlaneseq
      %v136 = vand.u32 %v135, 127
      %v137 = vadd.s32 %v136, 128
      %v138 = vcvt.s32.f32 %v136
      %v139 = vcvt.s32.f32 %v137
      %v140 = vmul.f32 %v138, 0.20134228
      %v141 = vmul.f32 %v139, 0.20134228
      %v142 = vadd.f32 %v140, 0.0
      %v143 = vadd.f32 %v141, 0.0
      %145 = vset.pattern.permute.xlu0 0
      %146 = vperm.xlu0 %145, %v122
      %v147 = vpop.permute.xlu0 %146
      %150 = vset.pattern.permute.xlu0 0
      %151 = vperm.xlu0 %150, %v123
      %v152 = vpop.permute.xlu0 %151
      %155 = vset.pattern.permute.xlu0 0
      %156 = vperm.xlu0 %155, %v124
      %v157 = vpop.permute.xlu0 %156
      %160 = vset.pattern.permute.xlu0 0
      %161 = vperm.xlu0 %160, %v125
      %v162 = vpop.permute.xlu0 %161
      %165 = vset.pattern.permute.xlu0 0
      %166 = vperm.xlu0 %165, %v126
      %v167 = vpop.permute.xlu0 %166
      %170 = vset.pattern.permute.xlu0 0
      %171 = vperm.xlu0 %170, %v127
      %v172 = vpop.permute.xlu0 %171
      %175 = vset.pattern.permute.xlu0 0
      %176 = vperm.xlu0 %175, %v128
      %v177 = vpop.permute.xlu0 %176
      %180 = vset.pattern.permute.xlu0 0
      %181 = vperm.xlu0 %180, %v129
      %v182 = vpop.permute.xlu0 %181
      %185 = vset.pattern.permute.xlu0 0
      %186 = vperm.xlu0 %185, %v130
      %v187 = vpop.permute.xlu0 %186
      %190 = vset.pattern.permute.xlu0 0
      %191 = vperm.xlu0 %190, %v131
      %v192 = vpop.permute.xlu0 %191
      %195 = vset.pattern.permute.xlu0 0
      %196 = vperm.xlu0 %195, %v132
      %v197 = vpop.permute.xlu0 %196
      %200 = vset.pattern.permute.xlu0 0
      %201 = vperm.xlu0 %200, %v133
      %v202 = vpop.permute.xlu0 %201
      %205 = vset.pattern.permute.xlu0 0
      %206 = vperm.xlu0 %205, %v134
      %v207 = vpop.permute.xlu0 %206
      %v209 = vsub.f32 %v147, %v142
      %v210 = vsub.f32 %v147, %v143
      %v211 = vsub.f32 %v152, %v142
      %v212 = vsub.f32 %v152, %v143
      %v213 = vsub.f32 %v157, %v142
      %v214 = vsub.f32 %v157, %v143
      %v215 = vsub.f32 %v162, %v142
      %v216 = vsub.f32 %v162, %v143
      %v217 = vsub.f32 %v167, %v142
      %v218 = vsub.f32 %v167, %v143
      %v219 = vsub.f32 %v172, %v142
      %v220 = vsub.f32 %v172, %v143
      %v221 = vsub.f32 %v177, %v142
      %v222 = vsub.f32 %v177, %v143
      %v223 = vsub.f32 %v182, %v142
      %v224 = vsub.f32 %v182, %v143
      %v225 = vsub.f32 %v187, %v142
      %v226 = vsub.f32 %v187, %v143
      %v227 = vsub.f32 %v192, %v142
      %v228 = vsub.f32 %v192, %v143
      %v229 = vsub.f32 %v197, %v142
      %v230 = vsub.f32 %v197, %v143
      %v231 = vsub.f32 %v202, %v142
      %v232 = vsub.f32 %v202, %v143
      %v233 = vsub.f32 %v207, %v142
      %v234 = vsub.f32 %v207, %v143
      %v235 = vmul.f32 %v209, %v209
      %v236 = vmul.f32 %v210, %v210
      %v237 = vmul.f32 %v211, %v211
      %v238 = vmul.f32 %v212, %v212
      %v239 = vmul.f32 %v213, %v213
      %v240 = vmul.f32 %v214, %v214
      %v241 = vmul.f32 %v215, %v215
      %v242 = vmul.f32 %v216, %v216
      %v243 = vmul.f32 %v217, %v217
      %v244 = vmul.f32 %v218, %v218
      %v245 = vmul.f32 %v219, %v219
      %v246 = vmul.f32 %v220, %v220
      %v247 = vmul.f32 %v221, %v221
      %v248 = vmul.f32 %v222, %v222
      %v249 = vmul.f32 %v223, %v223
      %v250 = vmul.f32 %v224, %v224
      %v251 = vmul.f32 %v225, %v225
      %v252 = vmul.f32 %v226, %v226
      %v253 = vmul.f32 %v227, %v227
      %v254 = vmul.f32 %v228, %v228
      %v255 = vmul.f32 %v229, %v229
      %v256 = vmul.f32 %v230, %v230
      %v257 = vmul.f32 %v231, %v231
      %v258 = vmul.f32 %v232, %v232
      %v259 = vmul.f32 %v233, %v233
      %v260 = vmul.f32 %v234, %v234
      %v261 = vmul.f32 %v235, -4.9666667
      %v262 = vmul.f32 %v236, -4.9666667
      %v263 = vmul.f32 %v237, -4.9666667
      %v264 = vmul.f32 %v238, -4.9666667
      %v265 = vmul.f32 %v239, -4.9666667
      %v266 = vmul.f32 %v240, -4.9666667
      %v267 = vmul.f32 %v241, -4.9666667
      %v268 = vmul.f32 %v242, -4.9666667
      %v269 = vmul.f32 %v243, -4.9666667
      %v270 = vmul.f32 %v244, -4.9666667
      %v271 = vmul.f32 %v245, -4.9666667
      %v272 = vmul.f32 %v246, -4.9666667
      %v273 = vmul.f32 %v247, -4.9666667
      %v274 = vmul.f32 %v248, -4.9666667
      %v275 = vmul.f32 %v249, -4.9666667
      %v276 = vmul.f32 %v250, -4.9666667
      %v277 = vmul.f32 %v251, -4.9666667
      %v278 = vmul.f32 %v252, -4.9666667
      %v279 = vmul.f32 %v253, -4.9666667
      %v280 = vmul.f32 %v254, -4.9666667
      %v281 = vmul.f32 %v255, -4.9666667
      %v282 = vmul.f32 %v256, -4.9666667
      %v283 = vmul.f32 %v257, -4.9666667
      %v284 = vmul.f32 %v258, -4.9666667
      %v285 = vmul.f32 %v259, -4.9666667
      %v286 = vmul.f32 %v260, -4.9666667
      %v287 = vmul.f32 %v261, 1.442695
      %v288 = vpow.pop %v287
      %v289 = vmul.f32 %v262, 1.442695
      %v290 = vpow.pop %v289
      %v291 = vmul.f32 %v263, 1.442695
      %v292 = vpow.pop %v291
      %v293 = vmul.f32 %v264, 1.442695
      %v294 = vpow.pop %v293
      %v295 = vmul.f32 %v265, 1.442695
      %v296 = vpow.pop %v295
      %v297 = vmul.f32 %v266, 1.442695
      %v298 = vpow.pop %v297
      %v299 = vmul.f32 %v267, 1.442695
      %v300 = vpow.pop %v299
      %v301 = vmul.f32 %v268, 1.442695
      %v302 = vpow.pop %v301
      %v303 = vmul.f32 %v269, 1.442695
      %v304 = vpow.pop %v303
      %v305 = vmul.f32 %v270, 1.442695
      %v306 = vpow.pop %v305
      %v307 = vmul.f32 %v271, 1.442695
      %v308 = vpow.pop %v307
      %v309 = vmul.f32 %v272, 1.442695
      %v310 = vpow.pop %v309
      %v311 = vmul.f32 %v273, 1.442695
      %v312 = vpow.pop %v311
      %v313 = vmul.f32 %v274, 1.442695
      %v314 = vpow.pop %v313
      %v315 = vmul.f32 %v275, 1.442695
      %v316 = vpow.pop %v315
      %v317 = vmul.f32 %v276, 1.442695
      %v318 = vpow.pop %v317
      %v319 = vmul.f32 %v277, 1.442695
      %v320 = vpow.pop %v319
      %v321 = vmul.f32 %v278, 1.442695
      %v322 = vpow.pop %v321
      %v323 = vmul.f32 %v279, 1.442695
      %v324 = vpow.pop %v323
      %v325 = vmul.f32 %v280, 1.442695
      %v326 = vpow.pop %v325
      %v327 = vmul.f32 %v281, 1.442695
      %v328 = vpow.pop %v327
      %v329 = vmul.f32 %v282, 1.442695
      %v330 = vpow.pop %v329
      %v331 = vmul.f32 %v283, 1.442695
      %v332 = vpow.pop %v331
      %v333 = vmul.f32 %v284, 1.442695
      %v334 = vpow.pop %v333
      %v335 = vmul.f32 %v285, 1.442695
      %v336 = vpow.pop %v335
      %v337 = vmul.f32 %v286, 1.442695
      %v338 = vpow.pop %v337
      %339 = vst [vmem:[%s120] sm:$0xff] %v288
      %vm340 = vcmask 179200
      %341 = vst.msk [vmem:[%s120 + $0x8] sm:$0xff] %vm340, %v290
      %342 = vst [vmem:[%s120 + $0x10] sm:$0xff] %v292
      %343 = vst.msk [vmem:[%s120 + $0x18] sm:$0xff] %vm340, %v294
      %344 = vst [vmem:[%s120 + $0x20] sm:$0xff] %v296
      %345 = vst.msk [vmem:[%s120 + $0x28] sm:$0xff] %vm340, %v298
      %346 = vst [vmem:[%s120 + $0x30] sm:$0xff] %v300
      %347 = vst.msk [vmem:[%s120 + $0x38] sm:$0xff] %vm340, %v302
      %348 = vst [vmem:[%s120 + $0x40] sm:$0xff] %v304
      %349 = vst.msk [vmem:[%s120 + $0x48] sm:$0xff] %vm340, %v306
      %350 = vst [vmem:[%s120 + $0x50] sm:$0xff] %v308
      %351 = vst.msk [vmem:[%s120 + $0x58] sm:$0xff] %vm340, %v310
      %352 = vst [vmem:[%s120 + $0x60] sm:$0xff] %v312
      %353 = vst.msk [vmem:[%s120 + $0x68] sm:$0xff] %vm340, %v314
      %354 = vst [vmem:[%s120 + $0x70] sm:$0xff] %v316
      %355 = vst.msk [vmem:[%s120 + $0x78] sm:$0xff] %vm340, %v318
      %356 = vst [vmem:[%s120 + $0x80] sm:$0xff] %v320
      %357 = vst.msk [vmem:[%s120 + $0x88] sm:$0xff] %vm340, %v322
      %358 = vst [vmem:[%s120 + $0x90] sm:$0xff] %v324
      %359 = vst.msk [vmem:[%s120 + $0x98] sm:$0xff] %vm340, %v326
      %360 = vst [vmem:[%s120 + $0xa0] sm:$0xff] %v328
      %361 = vst.msk [vmem:[%s120 + $0xa8] sm:$0xff] %vm340, %v330
      %362 = vst [vmem:[%s120 + $0xb0] sm:$0xff] %v332
      %363 = vst.msk [vmem:[%s120 + $0xb8] sm:$0xff] %vm340, %v334
      %364 = vst [vmem:[%s120 + $0xc0] sm:$0xff] %v336
      %365 = vst.msk [vmem:[%s120 + $0xc8] sm:$0xff] %vm340, %v338
      %s366 = smul.u32 13, %s12
      %p367 = scmp.lt.s32.totalorder %s366, 25
      %s368 = scalar_select %p367, %s366, 25
      %s369 = smul.addr %s368, 2
      %s370 = smul.addr %s369, 8
      %s371 = scalar_lea.vmem %s1, %s370
      // Predicated region
      $region25: #{tpu_custom_call.1} parent=23 // pred_check
        %p372 = pneg %p56
      $region26: #{tpu_custom_call.1} parent=23 // pred_check_branch
        %374 = sbr.rel (%p372) target = $region28
      $region27: #{tpu_custom_call.1} parent=23 // pred_region
        %s375 = smul.u32 13, %s12
      $region28: #{tpu_custom_call.1} parent=23 // pred_fallthru
        _
    $region24: #{tpu_custom_call.1} parent=5 // pred_fallthru
      _
    %p376 = scmp.le.s32.totalorder 2, %s7
    // Predicated region
    $region29: #{tpu_custom_call.1} parent=5 // pred_check
      %p377 = pneg %p376
    $region30: #{tpu_custom_call.1} parent=5 // pred_check_branch
      %379 = sbr.rel (%p377) target = $region32
    $region31: #{tpu_custom_call.1} parent=5 // pred_region
      %s380 = ssub.s32 %s7, 2
      // Predicated region
      $region33: #{tpu_custom_call.1} parent=31 // pred_check
        %p381 = pneg %p62
      $region34: #{tpu_custom_call.1} parent=31 // pred_check_branch
        %383 = sbr.rel (%p381) target = $region36
      $region35: #{tpu_custom_call.1} parent=31 // pred_region
        %s384 = smul.u32 13, %s13
        %p385 = scmp.lt.s32.totalorder %s384, 25
        %s386 = scalar_select %p385, %s384, 25
        %s387 = smul.addr %s386, 2
        %s388 = smul.addr %s387, 8
        %s389 = scalar_lea.vmem %s1, %s388
      $region36: #{tpu_custom_call.1} parent=31 // pred_fallthru
        _
    $region32: #{tpu_custom_call.1} parent=5 // pred_fallthru
      _
  $region6: #{tpu_custom_call.1} parent=0 // loop_footer
    %s11 = sadd.s32 1, %s7
  $region7: #{tpu_custom_call.1} parent=0 // loop_footer_branch
    %6 = sbr.rel target = $region3
  $region8: #{tpu_custom_call.1} parent=0 // loop_exit
    _

</llo_original>
